<compile_context>
chip_gen: v7x
topology: tpu7x:2x2x1
jax: 0.10.0
libtpu: 0.0.40
codegen_flags: <defaults>
</compile_context>

<pallas_src>
from functools import partial

import jax
import jax.numpy as jnp
from jax.experimental import pallas as pl
from jax.experimental.pallas import tpu as pltpu

_LANES = 128            # vreg lane width
_SUBLANES = 8           # f32 sublane packing
_MAX_BLOCK_ROWS = 2048  # 2048 * 128 * 4B = 1 MiB per f32 buffer (v7x-safe)
_PALLAS_MIN_ELEMS = 1024  # below this, launch overhead dominates -> use XLA


def _linear11_kernel(x_ref, w_ref, b_ref, o_ref):
    # x_ref: VMEM (block_rows, 128) -- lane/sublane-dense slab of the batch
    # w_ref: SMEM (1,)              -- nn.Linear(1,1) weight (scalar)
    # b_ref: SMEM (1,)              -- nn.Linear(1,1) bias   (scalar)
    # o_ref: VMEM (block_rows, 128)
    w = w_ref[0]
    b = b_ref[0]
    o_ref[...] = x_ref[...] * w + b


@jax.jit
def _linear11_pallas(x, weight, bias):
    """Tiled, lane-dense Pallas path.  x: (N, 1) f32."""
    n, f = x.shape  # f == 1 (static under jit)

    # --- lane/sublane-dense slab layout -------------------------------------
    rows_needed = pl.cdiv(n, _LANES)
    rows_needed = ((rows_needed + _SUBLANES - 1) // _SUBLANES) * _SUBLANES
    block_rows = min(_MAX_BLOCK_ROWS, rows_needed)          # multiple of 8
    num_blocks = pl.cdiv(rows_needed, block_rows)
    total_rows = num_blocks * block_rows
    padded = total_rows * _LANES

    x_flat = x.reshape(n)
    x_flat = jnp.pad(x_flat, (0, padded - n))                # pad -> sliced off
    slab = x_flat.reshape(total_rows, _LANES)

    out = pl.pallas_call(
        _linear11_kernel,
        out_shape=jax.ShapeDtypeStruct((total_rows, _LANES), x.dtype),
        grid=(num_blocks,),
        in_specs=[
            pl.BlockSpec((block_rows, _LANES), lambda i: (i, 0)),
            pl.BlockSpec(memory_space=pltpu.MemorySpace.SMEM),
            pl.BlockSpec(memory_space=pltpu.MemorySpace.SMEM),
        ],
        out_specs=pl.BlockSpec((block_rows, _LANES), lambda i: (i, 0)),
        compiler_params=pltpu.CompilerParams(
            dimension_semantics=("parallel",),   # v7x: shard batch over 2 TCs
        ),
    )(slab, weight.reshape(-1), bias.reshape(-1))

    return out.reshape(padded)[:n].reshape(n, 1)


@jax.jit
def _linear11_xla(x, weight, bias):
    # Fused scalar affine for tiny inputs (the module's nominal shape regime).
    return x * weight[0, 0] + bias[0]


def linear11_forward(x, weight, bias, *, force_pallas=False):
    """Pallas forward of ModelWithReloadedForward.

    x: (N, 1) f32, or {"tensor": (N, 1) f32}
    weight: (1, 1) f32   (torch nn.Linear(1, 1).weight)
    bias:   (1,)   f32   (torch nn.Linear(1, 1).bias)
    """
    # Dict dispatch is host-side Python, mirroring the module's intent.
    if isinstance(x, dict):
        x = x["tensor"]
    n, f = x.shape
    assert f == 1 and weight.shape == (1, 1) and bias.shape == (1,)

    if not force_pallas and n * f < _PALLAS_MIN_ELEMS:
        # Kernel launch + HBM round trip >> useful work at this size.
        return _linear11_xla(x, weight, bias)
    return _linear11_pallas(x, weight, bias)


def _reference(x, weight, bias):
    if isinstance(x, dict):
        x = x["tensor"]
    return x @ weight.T + bias[None, :]


if __name__ == "__main__":
    key = jax.random.PRNGKey(0)
    kw, kb, kx, kx2 = jax.random.split(key, 4)

    # Deterministic nn.Linear(1,1)-style params (uniform in [-1, 1]).
    weight = jax.random.uniform(kw, (1, 1), jnp.float32, minval=-1.0, maxval=1.0)
    bias = jax.random.uniform(kb, (1,), jnp.float32, minval=-1.0, maxval=1.0)

    # Module's INPUT_SHAPE is [1, 1]; use a small batch of 8 rows of 1 feature.
    x = jax.random.normal(kx, (8, 1), dtype=jnp.float32)
    ref = _reference(x, weight, bias)

    # 1) Pallas path (forced, since the nominal shape is tiny).
    out = jax.block_until_ready(linear11_forward(x, weight, bias, force_pallas=True))
    assert out.shape == (8, 1), out.shape
    assert jnp.allclose(out, ref, atol=1e-6, rtol=1e-6), (out, ref)

    # 2) Dict-input path ({"tensor": x}), as accepted by the torch module.
    out_dict = jax.block_until_ready(
        linear11_forward({"tensor": x}, weight, bias, force_pallas=True))
    assert jnp.allclose(out_dict, ref, atol=1e-6, rtol=1e-6), (out_dict, ref)

    # 3) Default tiny-input dispatch (XLA fused affine, no Pallas launch).
    out_xla = jax.block_until_ready(linear11_forward(x, weight, bias))
    assert jnp.allclose(out_xla, ref, atol=1e-6, rtol=1e-6), (out_xla, ref)

    # 4) Non-multiple-of-1024 batch: exercises padding/masking + slab tiling.
    x2 = jax.random.normal(kx2, (3000, 1), dtype=jnp.float32)
    ref2 = _reference(x2, weight, bias)
    out2 = jax.block_until_ready(linear11_forward(x2, weight, bias))
    assert out2.shape == (3000, 1), out2.shape
    assert jnp.allclose(out2, ref2, atol=1e-6, rtol=1e-6)

    print("KERNEL_OK")
</pallas_src>

<mosaic_0001>
module attributes {stable_mosaic.version = 11 : i64} {
  func.func @_linear11_kernel(%arg0: i32, %arg1: memref<8x128xf32, #tpu.memory_space<vmem>>, %arg2: memref<1xf32, #tpu.memory_space<smem>>, %arg3: memref<1xf32, #tpu.memory_space<smem>>, %arg4: memref<8x128xf32, #tpu.memory_space<vmem>>) attributes {dimension_semantics = [#tpu.dimension_semantics<parallel>], iteration_bounds = array<i64: 1>, scalar_prefetch = 0 : i64, scratch_operands = 0 : i64, tpu.core_type = #tpu.core_type<tc>, window_params = [{transform_indices = @transform_0, window_bounds = array<i64: 8, 128>}, {transform_indices = @transform_1, window_bounds = array<i64: 1>}, {transform_indices = @transform_2, window_bounds = array<i64: 1>}, {transform_indices = @transform_3, window_bounds = array<i64: 8, 128>}]} {
    %c0 = arith.constant 0 : index
    %0 = memref.load %arg2[%c0] : memref<1xf32, #tpu.memory_space<smem>>
    %c0_0 = arith.constant 0 : index
    %1 = memref.load %arg3[%c0_0] : memref<1xf32, #tpu.memory_space<smem>>
    %c0_1 = arith.constant 0 : index
    %c0_2 = arith.constant 0 : index
    %2 = vector.load %arg1[%c0_1, %c0_2] : memref<8x128xf32, #tpu.memory_space<vmem>>, vector<8x128xf32>
    %3 = vector.broadcast %0 : f32 to vector<8x128xf32>
    %4 = arith.mulf %2, %3 : vector<8x128xf32>
    %5 = vector.broadcast %1 : f32 to vector<8x128xf32>
    %6 = arith.addf %4, %5 : vector<8x128xf32>
    %c0_3 = arith.constant 0 : index
    %c0_4 = arith.constant 0 : index
    %7 = vector.load %arg4[%c0_3, %c0_4] : memref<8x128xf32, #tpu.memory_space<vmem>>, vector<8x128xf32>
    tpu.vector_store %arg4[%c0_3, %c0_4], %6 {strides = array<i32>} : memref<8x128xf32, #tpu.memory_space<vmem>>, vector<8x128xf32>,
    return
  }
  func.func @transform_0(%arg0: i32) -> (i32, i32) {
    %c0_i32 = arith.constant 0 : i32
    %c0_i32_0 = arith.constant 0 : i32
    return %arg0, %c0_i32 : i32, i32
  }
  func.func @transform_1(%arg0: i32) -> i32 {
    %c0_i32 = arith.constant 0 : i32
    %c0_i32_0 = arith.constant 0 : i32
    return %c0_i32 : i32
  }
  func.func @transform_2(%arg0: i32) -> i32 {
    %c0_i32 = arith.constant 0 : i32
    %c0_i32_0 = arith.constant 0 : i32
    return %c0_i32 : i32
  }
  func.func @transform_3(%arg0: i32) -> (i32, i32) {
    %c0_i32 = arith.constant 0 : i32
    %c0_i32_0 = arith.constant 0 : i32
    return %arg0, %c0_i32 : i32, i32
  }
}

</mosaic_0001>

<llo_original>
// kernel: _linear11_pallas.1
$region0: #{_linear11_pallas.1}
  #allocation0 [shape = 'u32[]', space=smem, size = 0x4, offset = 0x4, fixed_abs, tag = 'smem constant byte address 0x4 - core index']
  #allocation1 [shape = 'u32[144,128]{1,0:T(1,128)}', space=vmem, size = 0x12000, scoped, tag = 'internal scratch']
  #allocation2 [shape = 'f32[1]{0:T(128)S(6)}', space=smem, size = 0x200, scoped, tag = 'scoped memory for _linear11_pallas.1']
  #allocation3 [shape = 'f32[1]{0:T(128)S(6)}', space=smem, size = 0x200, scoped, tag = 'scoped memory for _linear11_pallas.1']
  %s0 = inlined_call_operand.vmem [shape: f32[8,128], index: 0, kind: input, shape index: {}]
  %s1 = inlined_call_operand.<no memory space> [shape: f32[1], index: 1, kind: input, shape index: {}]
  %s2 = inlined_call_operand.<no memory space> [shape: f32[1], index: 2, kind: input, shape index: {}]
  %s3 = inlined_call_operand.vmem [shape: f32[8,128], index: 3, kind: output, shape index: {}]
  %s4 = sld [smem:[#allocation0]]
  $region22: #{_linear11_pallas.1} parent=0
    _
  %s6 = ssub.s32 1, %s4
  %s7 = scalar_select 0, %s6, %s4
  %8 = sst [smem:[#allocation2]] %s1
  %9 = sst [smem:[#allocation3]] %s2
  // Predicated region
  $region2: #{_linear11_pallas.1} parent=0 // pred_check
    _
  $region3: #{_linear11_pallas.1} parent=0 // pred_check_branch
    %11 = sbr.rel (0) target = $region5
  $region4: #{_linear11_pallas.1} parent=0 // pred_region
    _
  $region5: #{_linear11_pallas.1} parent=0 // pred_fallthru
    _
  // Predicated region
  $region6: #{_linear11_pallas.1} parent=0 // pred_check
    _
  $region7: #{_linear11_pallas.1} parent=0 // pred_check_branch
    %13 = sbr.rel (0) target = $region9
  $region8: #{_linear11_pallas.1} parent=0 // pred_region
    _
  $region9: #{_linear11_pallas.1} parent=0 // pred_fallthru
    _
  // Predicated region
  $region10: #{_linear11_pallas.1} parent=0 // pred_check
    _
  $region11: #{_linear11_pallas.1} parent=0 // pred_check_branch
    %15 = sbr.rel (0) target = $region13
  $region12: #{_linear11_pallas.1} parent=0 // pred_region
    _
  $region13: #{_linear11_pallas.1} parent=0 // pred_fallthru
    _
  %s16 = sld [smem:[#allocation2]]
  %s17 = sld [smem:[#allocation3]]
  %v18 = vld [vmem:[%s0] sm:$0xff]
  %v19 = vstv %s16
  %v20 = vmul.f32 %v18, %v19
  %v21 = vstv %s17
  %v22 = vadd.f32 %v20, %v21
  %23 = vst [vmem:[%s3] sm:$0xff] %v22
  // Predicated region
  $region14: #{_linear11_pallas.1} parent=0 // pred_check
    _
  $region15: #{_linear11_pallas.1} parent=0 // pred_check_branch
    %25 = sbr.rel (0) target = $region17
  $region16: #{_linear11_pallas.1} parent=0 // pred_region
    _
  $region17: #{_linear11_pallas.1} parent=0 // pred_fallthru
    _
  // Predicated region
  $region18: #{_linear11_pallas.1} parent=0 // pred_check
    _
  $region19: #{_linear11_pallas.1} parent=0 // pred_check_branch
    %27 = sbr.rel (0) target = $region21
  $region20: #{_linear11_pallas.1} parent=0 // pred_region
    _
  $region21: #{_linear11_pallas.1} parent=0 // pred_fallthru
    _

</llo_original>
